<compile_context>
chip_gen: v6e
topology: v6e:2x2x1
jax: 0.10.0
libtpu: 0.0.40
codegen_flags: <defaults>
</compile_context>

<pallas_src>
import jax
import jax.numpy as jnp
from jax.experimental import pallas as pl
from jax.experimental.pallas import tpu as pltpu

EPS = 1e-5
_VMEM_LIMIT = 32 * 1024 * 1024   # safe inside v5e/v6e scoped default and v7x physical VMEM


def _round_up(a, b):
    return (a + b - 1) // b * b


# ---------------- pass 1: conv GEMM + per-channel sum / sum-of-squares -------
def _stats_kernel(p_ref, w_ref, s1_ref, s2_ref):
    c = jnp.dot(p_ref[...], w_ref[...], preferred_element_type=jnp.float32)

    @pl.when(pl.program_id(1) == 0)
    def _():
        s1_ref[...] = jnp.zeros_like(s1_ref)
        s2_ref[...] = jnp.zeros_like(s2_ref)

    s1 = jnp.sum(c, axis=0, keepdims=True)        # (1, rC)
    s2 = jnp.sum(c * c, axis=0, keepdims=True)    # (1, rC)
    s1_ref[...] += s1.reshape(1, 1, -1)
    s2_ref[...] += s2.reshape(1, 1, -1)


# ---------------- pass 2: conv GEMM + folded BN (scale/shift) + ReLU ---------
def _conv_bn_relu_kernel(p_ref, w_ref, scale_ref, shift_ref, out_ref):
    c = jnp.dot(p_ref[...], w_ref[...], preferred_element_type=jnp.float32)
    y = c * scale_ref[...] + shift_ref[...]
    out_ref[...] = jnp.maximum(y, 0.0).astype(out_ref.dtype)


def stem_layer_nhwc(x_nhwc, weight, gamma, beta, stride, *,
                    block_m=4096, out_dtype=jnp.float32, num_cores=2):
    """x_nhwc: (N, H, W, Cin); weight: (Cout, Cin, 3, 3) -> (N, Hout, Wout, Cout)."""
    N, H, W, Cin = x_nhwc.shape
    Cout = weight.shape[0]
    KH = KW = 3
    Hout = (H + 2 - KH) // stride + 1
    Wout = (W + 2 - KW) // stride + 1
    M = N * Hout * Wout
    K = KH * KW * Cin

    # Row-packing factor: pack r consecutive output rows per 128-lane output row
    # (this is exactly the contiguous NHWC byte layout), so stores are lane-dense
    # with NO channel padding.  Falls back to r=1 (unpadded, masked stores) when
    # Cout doesn't divide 128.
    r = 128 // Cout if (Cout < 128 and 128 % Cout == 0) else 1
    rK, rC = r * K, r * Cout

    # ---- im2col (XLA glue; see TODO at top) ----
    xp = jnp.pad(x_nhwc, ((0, 0), (1, 1), (1, 1), (0, 0)))
    taps = [xp[:, kh:kh + stride * Hout:stride, kw:kw + stride * Wout:stride, :]
            for kh in range(KH) for kw in range(KW)]
    patches = jnp.concatenate(taps, axis=-1).reshape(M, K)

    # ---- tiling / padding (rows only; channels are never padded) ----
    sub = 16 * r                                          # TM//r multiple of 16
    TM = _round_up(min(block_m, _round_up(M, sub)), sub)  # rows of conv output per tile
    NC = max(1, num_cores)
    S = pl.cdiv(pl.cdiv(M, TM), NC)                       # pass-1 M-tiles per core
    Mp = NC * S * TM
    n_tiles = Mp // TM

    patches = jnp.pad(patches, ((0, Mp - M), (0, 0))).astype(jnp.bfloat16)
    packed = patches.reshape(Mp // r, rK)                 # contiguous repack (free view)

    # weight (Cout,Cin,KH,KW) -> (KH,KW,Cin,Cout) -> (K, Cout), matching the
    # (kh, kw, cin) flatten order of the patches.  Block-diagonal r copies so the
    # packed GEMM emits r consecutive conv rows per output row.
    w_mat = jnp.transpose(weight, (2, 3, 1, 0)).reshape(K, Cout).astype(jnp.float32)
    w_bd = jnp.kron(jnp.eye(r, dtype=jnp.float32), w_mat).astype(jnp.bfloat16)

    # ---- pass 1: per-channel sum / sumsq; one resident accumulator pair per core ----
    s1_acc, s2_acc = pl.pallas_call(
        _stats_kernel,
        out_shape=(jax.ShapeDtypeStruct((NC, 1, rC), jnp.float32),
                   jax.ShapeDtypeStruct((NC, 1, rC), jnp.float32)),
        grid=(NC, S),
        in_specs=[
            pl.BlockSpec((TM // r, rK), lambda c, i: (c * S + i, 0)),   # patches tile
            pl.BlockSpec((rK, rC), lambda c, i: (0, 0)),                # weight, resident
        ],
        out_specs=(pl.BlockSpec((1, 1, rC), lambda c, i: (c, 0, 0)),
                   pl.BlockSpec((1, 1, rC), lambda c, i: (c, 0, 0))),
        compiler_params=pltpu.CompilerParams(
            dimension_semantics=("parallel", "arbitrary"),   # 2 TCs on v7x; harmless on 1-TC chips
            vmem_limit_bytes=_VMEM_LIMIT),
    )(packed, w_bd)

    # ---- fold BN into one per-channel scale/shift (true M; pad rows are zero) ----
    inv_m = 1.0 / float(M)
    s1 = s1_acc.sum(axis=(0, 1)).reshape(r, Cout).sum(axis=0)     # (Cout,)
    s2 = s2_acc.sum(axis=(0, 1)).reshape(r, Cout).sum(axis=0)
    mean = s1 * inv_m
    var = jnp.maximum(s2 * inv_m - mean * mean, 0.0)              # biased var, PyTorch-style
    scale_c = gamma.astype(jnp.float32) * jax.lax.rsqrt(var + EPS)
    shift_c = beta.astype(jnp.float32) - mean * scale_c
    scale = jnp.tile(scale_c, r).reshape(1, rC)                   # packed channel layout
    shift = jnp.tile(shift_c, r).reshape(1, rC)

    # ---- pass 2: recompute conv tile, apply BN + ReLU, unpadded lane-dense store ----
    out_p = pl.pallas_call(
        _conv_bn_relu_kernel,
        out_shape=jax.ShapeDtypeStruct((Mp // r, rC), out_dtype),
        grid=(n_tiles,),
        in_specs=[
            pl.BlockSpec((TM // r, rK), lambda i: (i, 0)),   # patches tile
            pl.BlockSpec((rK, rC), lambda i: (0, 0)),        # weight, resident
            pl.BlockSpec((1, rC), lambda i: (0, 0)),         # scale, resident
            pl.BlockSpec((1, rC), lambda i: (0, 0)),         # shift, resident
        ],
        out_specs=pl.BlockSpec((TM // r, rC), lambda i: (i, 0)),
        compiler_params=pltpu.CompilerParams(
            dimension_semantics=("parallel",),
            vmem_limit_bytes=_VMEM_LIMIT),
    )(packed, w_bd, scale, shift)

    out = out_p.reshape(Mp, Cout)
    if Mp != M:
        out = out[:M]                 # row-prefix slice only; no channel slice
    return out.reshape(N, Hout, Wout, Cout)


def stem_layer(x_nchw, weight, gamma, beta, stride, **kw):
    """PyTorch-convention NCHW adapter around the NHWC-native kernels."""
    x_nhwc = jnp.transpose(x_nchw, (0, 2, 3, 1))
    out_nhwc = stem_layer_nhwc(x_nhwc, weight, gamma, beta, stride, **kw)
    return jnp.transpose(out_nhwc, (0, 3, 1, 2))


def _reference(x_nchw, weight, gamma, beta, stride, conv_in_dtype):
    """Plain-JAX reference: conv (optionally bf16 operands, f32 acc) + BN + ReLU."""
    conv = jax.lax.conv_general_dilated(
        x_nchw.astype(conv_in_dtype), weight.astype(conv_in_dtype),
        window_strides=(stride, stride), padding=((1, 1), (1, 1)),
        dimension_numbers=("NCHW", "OIHW", "NCHW"),
        preferred_element_type=jnp.float32)
    mean = jnp.mean(conv, axis=(0, 2, 3), keepdims=True)
    var = jnp.mean(jnp.square(conv - mean), axis=(0, 2, 3), keepdims=True)
    xhat = (conv - mean) * jax.lax.rsqrt(var + EPS)
    y = xhat * gamma.reshape(1, -1, 1, 1) + beta.reshape(1, -1, 1, 1)
    return jnp.maximum(y, 0.0)


if __name__ == "__main__":
    key = jax.random.PRNGKey(0)
    N, Cin, H, W = 2, 4, 16, 16
    Cout, stride = 32, 2

    kx, kw = jax.random.split(key)
    x = jax.random.normal(kx, (N, Cin, H, W), dtype=jnp.float32)
    weight = jax.random.normal(kw, (Cout, Cin, 3, 3), dtype=jnp.float32) * 0.1
    gamma = jnp.ones((Cout,), dtype=jnp.float32)   # BatchNorm2d default weight
    beta = jnp.zeros((Cout,), dtype=jnp.float32)   # BatchNorm2d default bias

    ref_bf16 = _reference(x, weight, gamma, beta, stride, jnp.bfloat16)
    ref_f32 = _reference(x, weight, gamma, beta, stride, jnp.float32)

    # block_m=64 -> multiple M-tiles per core (exercises the tiled pipeline and
    # cross-tile stats accumulation); default block_m exercises the padded-M path.
    for bm in (64, 4096):
        out = stem_layer(x, weight, gamma, beta, stride, block_m=bm)
        out = jax.block_until_ready(out)

        assert out.shape == (N, Cout, H // stride, W // stride), out.shape
        # Tight check vs. a reference matching the kernel's bf16-MXU / f32-acc choice.
        assert jnp.allclose(out, ref_bf16, atol=1e-4, rtol=1e-4), \
            (bm, float(jnp.max(jnp.abs(out - ref_bf16))))
        # Coarse check vs. full-f32 PyTorch semantics (difference is bf16 rounding
        # of the GEMM operands only).
        assert jnp.allclose(out, ref_f32, atol=5e-2, rtol=5e-2), \
            (bm, float(jnp.max(jnp.abs(out - ref_f32))))

    print("KERNEL_OK")
</pallas_src>

<mosaic_0001>
module attributes {stable_mosaic.version = 11 : i64} {
  func.func @_stats_kernel(%arg0: i32, %arg1: i32, %arg2: memref<16x144xbf16, #tpu.memory_space<vmem>>, %arg3: memref<144x128xbf16, #tpu.memory_space<vmem>>, %arg4: memref<1x1x128xf32, #tpu.memory_space<vmem>>, %arg5: memref<1x1x128xf32, #tpu.memory_space<vmem>>) attributes {dimension_semantics = [#tpu.dimension_semantics<parallel>, #tpu.dimension_semantics<arbitrary>], iteration_bounds = array<i64: 2, 1>, scalar_prefetch = 0 : i64, scratch_operands = 0 : i64, tpu.core_type = #tpu.core_type<tc>, window_params = [{transform_indices = @transform_0, window_bounds = array<i64: 16, 144>}, {pipeline_mode = #tpu.pipeline_mode<synchronous>, transform_indices = @transform_1, window_bounds = array<i64: 144, 128>}, {transform_indices = @transform_2, window_bounds = array<i64: 1, 1, 128>}, {transform_indices = @transform_3, window_bounds = array<i64: 1, 1, 128>}]} {
    %c0 = arith.constant 0 : index
    %c0_0 = arith.constant 0 : index
    %0 = vector.load %arg2[%c0, %c0_0] : memref<16x144xbf16, #tpu.memory_space<vmem>>, vector<16x144xbf16>
    %c0_1 = arith.constant 0 : index
    %c0_2 = arith.constant 0 : index
    %1 = vector.load %arg3[%c0_1, %c0_2] : memref<144x128xbf16, #tpu.memory_space<vmem>>, vector<144x128xbf16>
    %cst = arith.constant dense<0.000000e+00> : vector<16x128xf32>
    %2 = tpu.matmul %0, %1, %cst {dimension_numbers = #tpu.dot_dimension_numbers<[1], [0], [0], [1], [0, 0, 1, 1], [], []>} : vector<16x144xbf16>, vector<144x128xbf16>, vector<16x128xf32> -> vector<16x128xf32>
    %c0_i32 = arith.constant 0 : i32
    %3 = arith.cmpi eq, %arg1, %c0_i32 : i32
    %4 = arith.extui %3 : i1 to i32
    %c0_i32_3 = arith.constant 0 : i32
    %5 = arith.cmpi ne, %4, %c0_i32_3 : i32
    scf.if %5 {
      %cst_18 = arith.constant 0.000000e+00 : f32
      %19 = vector.broadcast %cst_18 : f32 to vector<1x1x128xf32>
      %c0_19 = arith.constant 0 : index
      %c0_20 = arith.constant 0 : index
      %c0_21 = arith.constant 0 : index
      %20 = vector.load %arg4[%c0_19, %c0_20, %c0_21] : memref<1x1x128xf32, #tpu.memory_space<vmem>>, vector<1x1x128xf32>
      tpu.vector_store %arg4[%c0_19, %c0_20, %c0_21], %19 {strides = array<i32>} : memref<1x1x128xf32, #tpu.memory_space<vmem>>, vector<1x1x128xf32>,
      %cst_22 = arith.constant 0.000000e+00 : f32
      %21 = vector.broadcast %cst_22 : f32 to vector<1x1x128xf32>
      %c0_23 = arith.constant 0 : index
      %c0_24 = arith.constant 0 : index
      %c0_25 = arith.constant 0 : index
      %22 = vector.load %arg5[%c0_23, %c0_24, %c0_25] : memref<1x1x128xf32, #tpu.memory_space<vmem>>, vector<1x1x128xf32>
      tpu.vector_store %arg5[%c0_23, %c0_24, %c0_25], %21 {strides = array<i32>} : memref<1x1x128xf32, #tpu.memory_space<vmem>>, vector<1x1x128xf32>,
    } else {
    }
    %cst_4 = arith.constant dense<0.000000e+00> : vector<128xf32>
    %6 = vector.multi_reduction <add>, %2, %cst_4 [0] : vector<16x128xf32> to vector<128xf32>
    %7 = vector.shape_cast %6 : vector<128xf32> to vector<1x128xf32>
    %8 = arith.mulf %2, %2 : vector<16x128xf32>
    %cst_5 = arith.constant dense<0.000000e+00> : vector<128xf32>
    %9 = vector.multi_reduction <add>, %8, %cst_5 [0] : vector<16x128xf32> to vector<128xf32>
    %10 = vector.shape_cast %9 : vector<128xf32> to vector<1x128xf32>
    %c0_6 = arith.constant 0 : index
    %c0_7 = arith.constant 0 : index
    %c0_8 = arith.constant 0 : index
    %11 = vector.load %arg4[%c0_6, %c0_7, %c0_8] : memref<1x1x128xf32, #tpu.memory_space<vmem>>, vector<1x1x128xf32>
    %12 = vector.shape_cast %7 : vector<1x128xf32> to vector<1x1x128xf32>
    %13 = arith.addf %11, %12 : vector<1x1x128xf32>
    %c0_9 = arith.constant 0 : index
    %c0_10 = arith.constant 0 : index
    %c0_11 = arith.constant 0 : index
    %14 = vector.load %arg4[%c0_9, %c0_10, %c0_11] : memref<1x1x128xf32, #tpu.memory_space<vmem>>, vector<1x1x128xf32>
    tpu.vector_store %arg4[%c0_9, %c0_10, %c0_11], %13 {strides = array<i32>} : memref<1x1x128xf32, #tpu.memory_space<vmem>>, vector<1x1x128xf32>,
    %c0_12 = arith.constant 0 : index
    %c0_13 = arith.constant 0 : index
    %c0_14 = arith.constant 0 : index
    %15 = vector.load %arg5[%c0_12, %c0_13, %c0_14] : memref<1x1x128xf32, #tpu.memory_space<vmem>>, vector<1x1x128xf32>
    %16 = vector.shape_cast %10 : vector<1x128xf32> to vector<1x1x128xf32>
    %17 = arith.addf %15, %16 : vector<1x1x128xf32>
    %c0_15 = arith.constant 0 : index
    %c0_16 = arith.constant 0 : index
    %c0_17 = arith.constant 0 : index
    %18 = vector.load %arg5[%c0_15, %c0_16, %c0_17] : memref<1x1x128xf32, #tpu.memory_space<vmem>>, vector<1x1x128xf32>
    tpu.vector_store %arg5[%c0_15, %c0_16, %c0_17], %17 {strides = array<i32>} : memref<1x1x128xf32, #tpu.memory_space<vmem>>, vector<1x1x128xf32>,
    return
  }
  func.func @transform_0(%arg0: i32, %arg1: i32) -> (i32, i32) {
    %c1_i32 = arith.constant 1 : i32
    %0 = arith.muli %arg0, %c1_i32 : i32
    %1 = arith.addi %0, %arg1 : i32
    %c0_i32 = arith.constant 0 : i32
    %c0_i32_0 = arith.constant 0 : i32
    return %1, %c0_i32 : i32, i32
  }
  func.func @transform_1(%arg0: i32, %arg1: i32) -> (i32, i32) {
    %c0_i32 = arith.constant 0 : i32
    %c0_i32_0 = arith.constant 0 : i32
    %c0_i32_1 = arith.constant 0 : i32
    return %c0_i32, %c0_i32_0 : i32, i32
  }
  func.func @transform_2(%arg0: i32, %arg1: i32) -> (i32, i32, i32) {
    %c0_i32 = arith.constant 0 : i32
    %c0_i32_0 = arith.constant 0 : i32
    %c0_i32_1 = arith.constant 0 : i32
    return %arg0, %c0_i32, %c0_i32_0 : i32, i32, i32
  }
  func.func @transform_3(%arg0: i32, %arg1: i32) -> (i32, i32, i32) {
    %c0_i32 = arith.constant 0 : i32
    %c0_i32_0 = arith.constant 0 : i32
    %c0_i32_1 = arith.constant 0 : i32
    return %arg0, %c0_i32, %c0_i32_0 : i32, i32, i32
  }
}

</mosaic_0001>

<llo_original>
// kernel: tpu_custom_call.1
$region0: #{tpu_custom_call.1}
  #allocation0 [shape = 'u32[]', space=smem, size = 0x4, offset = 0x4, fixed_abs, tag = 'smem constant byte address 0x4 - core index']
  #allocation1 [shape = 'u32[144,128]{1,0:T(1,128)}', space=vmem, size = 0x12000, scoped, tag = 'internal scratch']
  %s0 = inlined_call_operand.hbm [shape: bf16[32,144], index: 0, kind: input, shape index: {}]
  %s1 = inlined_call_operand.hbm [shape: bf16[144,128], index: 1, kind: input, shape index: {}]
  %s2 = inlined_call_operand.hbm [shape: f32[2,1,128], index: 2, kind: output, shape index: {0}]
  %s3 = inlined_call_operand.hbm [shape: f32[2,1,128], index: 3, kind: output, shape index: {1}]
  %4 = xla_tuple %s2, %s3
  %s5 = sld [smem:[#allocation0]]
  $region61: #{tpu_custom_call.1} parent=0
    _
  %s7 = ssub.s32 1, %s5
  %s8 = scalar_select 0, %s7, %s5
  $region1: #{tpu_custom_call.1} parent=0
    #allocation2 [shape = 'u8[16384]{0}', space=vmem, size = 0x4000, scoped, tag = 'input window, operand 0']
    #allocation3 [shape = 's32[2]{0}', space=sflag, size = 0x8, scoped, tag = 'scoped memory for tpu_custom_call.1']
    #allocation4 [shape = 's32[2]{0}', space=sflag, size = 0x8, scoped, tag = 'scoped memory for tpu_custom_call.1']
    #allocation5 [shape = 'u8[36864]{0}', space=vmem, size = 0x9000, scoped, tag = 'input window, operand 1, single buffered']
    #allocation6 [shape = 's32[1]{0}', space=sflag, size = 0x4, scoped, tag = 'scoped memory for tpu_custom_call.1']
    #allocation7 [shape = 'u8[1024]{0}', space=vmem, size = 0x400, scoped, tag = 'output window, operand 0']
    #allocation8 [shape = 'u8[1024]{0}', space=vmem, size = 0x400, scoped, tag = 'output window, operand 1']
    #allocation9 [shape = 's32[2]{0}', space=sflag, size = 0x8, scoped, tag = 'scoped memory for tpu_custom_call.1']
    %9 = vsyncpa [#allocation3], 0
    %s10 = scalar_lea.sflag [#allocation3], 1
    %11 = vsyncpa %s10, 0
    %12 = vsyncpa [#allocation6], 0
    %13 = vsyncpa [#allocation4], 0
    %s14 = scalar_lea.sflag [#allocation4], 1
    %15 = vsyncpa %s14, 0
    %16 = vsyncpa [#allocation9], 0
    %s17 = scalar_lea.sflag [#allocation9], 1
    %18 = vsyncpa %s17, 0
    loop: start=0, step=1, limit=4
    $region2: #{tpu_custom_call.1} parent=1 // loop_pre_header
      _
    $region3: #{tpu_custom_call.1} parent=1 // loop_header
      %s20 = sphi 0, %s24
      %p21 = scmp.ge.s32.totalorder %s20, 4
      %s27 = sphi 0, %s39
      %s28 = sphi 0, %s35
      %s29 = sphi 0, %s27
      %s30 = sphi 0, %s28
      %s31 = sphi 0, %s29
      %s32 = sphi 0, %s30
      %s44 = sphi 0, %s46
      %s47 = sphi 0, %s44
      %s48 = sphi 0, %s47
      %s64 = sphi 0, %s48
      %s68 = sphi 0, %s68
      %s70 = sphi 0, %s68
      %s71 = sphi 0, %s70
      %s85 = sphi 0, %s71
      %s91 = sphi 0, %s93
      %s94 = sphi 0, %s91
      %s95 = sphi 0, %s94
      %s111 = sphi 0, %s95
      %s117 = sphi 0, %s119
      %s120 = sphi 0, %s117
      %s121 = sphi 0, %s120
      %s137 = sphi 0, %s121
    $region4: #{tpu_custom_call.1} parent=1 // loop_header_branch
      %23 = sbr.rel (%p21) target = $region8
    $region5: #{tpu_custom_call.1} parent=1 // loop_body
      %s25 = ssub.s32 %s20, 1
      %s26 = ssub.s32 %s20, 2
      %s33 = sadd.s32 1, %s28
      %p34 = scmp.ge.s32.totalorder %s33, 1
      %s35 = scalar_select %p34, 0, %s33
      %s36 = sadd.s32 1, %s27
      %s37 = scalar_select %p34, %s36, %s27
      %p38 = scmp.ge.s32.totalorder %s37, 2
      %s39 = scalar_select %p38, 0, %s37
      %s40 = sadd.s32 %s27, %s28
      %s41 = sadd.s32 %s39, %s35
      %s42 = ssub.s32 %s40, %s41
      %p43 = scmp.eq.s32.totalorder %s42, 0
      %s45 = sadd.s32 %s44, 1
      %s46 = scalar_select %p43, %s44, %s45
      %p49 = pneg %p43
      %p50 = scmp.eq.s32.totalorder %s20, 1
      %p51 = por %p49, %p50
      %p52 = scmp.ne.s32.totalorder %s44, %s47
      %p53 = scmp.eq.s32.totalorder %s20, 0
      %p54 = por %p52, %p53
      %p55 = scmp.ne.s32.totalorder %s44, %s47
      %p56 = scmp.eq.s32.totalorder %s25, 1
      %p57 = por %p55, %p56
      %p58 = scmp.ne.s32.totalorder %s47, %s48
      %p59 = scmp.eq.s32.totalorder %s25, 0
      %p60 = por %p58, %p59
      %p61 = scmp.ne.s32.totalorder %s47, %s48
      %p62 = scmp.eq.s32.totalorder %s26, 1
      %p63 = por %p61, %p62
      %p65 = scmp.ne.s32.totalorder %s48, %s64
      %p66 = scmp.eq.s32.totalorder %s26, 0
      %p67 = por %p65, %p66
      %s69 = sadd.s32 %s68, 1
      %p72 = scmp.eq.s32.totalorder %s20, 1
      %p73 = scmp.ne.s32.totalorder %s68, %s70
      %p74 = scmp.eq.s32.totalorder %s20, 0
      %p75 = por %p73, %p74
      %p76 = scmp.ne.s32.totalorder %s68, %s70
      %p77 = scmp.eq.s32.totalorder %s25, 1
      %p78 = por %p76, %p77
      %p79 = scmp.ne.s32.totalorder %s70, %s71
      %p80 = scmp.eq.s32.totalorder %s25, 0
      %p81 = por %p79, %p80
      %p82 = scmp.ne.s32.totalorder %s70, %s71
      %p83 = scmp.eq.s32.totalorder %s26, 1
      %p84 = por %p82, %p83
      %p86 = scmp.ne.s32.totalorder %s71, %s85
      %p87 = scmp.eq.s32.totalorder %s26, 0
      %p88 = por %p86, %p87
      %s89 = ssub.s32 %s27, %s39
      %p90 = scmp.eq.s32.totalorder %s89, 0
      %s92 = sadd.s32 %s91, 1
      %s93 = scalar_select %p90, %s91, %s92
      %p96 = pneg %p90
      %p97 = scmp.eq.s32.totalorder %s20, 1
      %p98 = por %p96, %p97
      %p99 = scmp.ne.s32.totalorder %s91, %s94
      %p100 = scmp.eq.s32.totalorder %s20, 0
      %p101 = por %p99, %p100
      %p102 = scmp.ne.s32.totalorder %s91, %s94
      %p103 = scmp.eq.s32.totalorder %s25, 1
      %p104 = por %p102, %p103
      %p105 = scmp.ne.s32.totalorder %s94, %s95
      %p106 = scmp.eq.s32.totalorder %s25, 0
      %p107 = por %p105, %p106
      %p108 = scmp.ne.s32.totalorder %s94, %s95
      %p109 = scmp.eq.s32.totalorder %s26, 1
      %p110 = por %p108, %p109
      %p112 = scmp.ne.s32.totalorder %s95, %s111
      %p113 = scmp.eq.s32.totalorder %s26, 0
      %p114 = por %p112, %p113
      %s115 = ssub.s32 %s27, %s39
      %p116 = scmp.eq.s32.totalorder %s115, 0
      %s118 = sadd.s32 %s117, 1
      %s119 = scalar_select %p116, %s117, %s118
      %p122 = pneg %p116
      %p123 = scmp.eq.s32.totalorder %s20, 1
      %p124 = por %p122, %p123
      %p125 = scmp.ne.s32.totalorder %s117, %s120
      %p126 = scmp.eq.s32.totalorder %s20, 0
      %p127 = por %p125, %p126
      %p128 = scmp.ne.s32.totalorder %s117, %s120
      %p129 = scmp.eq.s32.totalorder %s25, 1
      %p130 = por %p128, %p129
      %p131 = scmp.ne.s32.totalorder %s120, %s121
      %p132 = scmp.eq.s32.totalorder %s25, 0
      %p133 = por %p131, %p132
      %p134 = scmp.ne.s32.totalorder %s120, %s121
      %p135 = scmp.eq.s32.totalorder %s26, 1
      %p136 = por %p134, %p135
      %p138 = scmp.ne.s32.totalorder %s121, %s137
      %p139 = scmp.eq.s32.totalorder %s26, 0
      %p140 = por %p138, %p139
      %p141 = scmp.le.s32.totalorder 1, %s20
      %p142 = scmp.lt.s32.totalorder %s20, 3
      %p143 = pnand %p141, %p142
      %p144 = pneg %p143
      // Predicated region
      $region9: #{tpu_custom_call.1} parent=5 // pred_check
        _
      $region10: #{tpu_custom_call.1} parent=5 // pred_check_branch
        %146 = sbr.rel (%p143) target = $region12
      $region11: #{tpu_custom_call.1} parent=5 // pred_region
        %s147 = ssub.s32 %s20, 1
        // Predicated region
        $region13: #{tpu_custom_call.1} parent=11 // pred_check
          %p148 = pneg %p81
        $region14: #{tpu_custom_call.1} parent=11 // pred_check_branch
          %150 = sbr.rel (%p148) target = $region16
        $region15: #{tpu_custom_call.1} parent=11 // pred_region
          %s152 = ssub.s32 1152, 1152
          %153 = vsyncadd [#allocation6], %s152
          %s154 = sshll.u32 [#allocation5], 4
          %s155 = int_to_ptr.vmem [resolvable:$true] %s154
          %160 = dma.hbm_to_vmem [thread:$0]  %s1, 1152, %s155, [#allocation6], 64, 64, 4
        $region16: #{tpu_custom_call.1} parent=11 // pred_fallthru
          _
      $region12: #{tpu_custom_call.1} parent=5 // pred_fallthru
        _
      %p161 = scmp.lt.s32.totalorder %s20, 2
      // Predicated region
      $region17: #{tpu_custom_call.1} parent=5 // pred_check
        %p162 = pneg %p161
      $region18: #{tpu_custom_call.1} parent=5 // pred_check_branch
        %164 = sbr.rel (%p162) target = $region20
      $region19: #{tpu_custom_call.1} parent=5 // pred_region
        // Predicated region
        $region21: #{tpu_custom_call.1} parent=19 // pred_check
          %p165 = pneg %p54
        $region22: #{tpu_custom_call.1} parent=19 // pred_check_branch
          %167 = sbr.rel (%p165) target = $region24
        $region23: #{tpu_custom_call.1} parent=19 // pred_region
          %s168 = sand.u32 %s44, 1
          %s169 = scalar_lea.sflag [#allocation3], %s168
          %s170 = sand.u32 %s44, 1
          %s171 = smul.addr %s170, 16
          %s172 = scalar_lea.vmem [#allocation2], %s171
          %s173 = sadd.s32 %s27, %s28
          %s174 = smul.u32 2, %s173
          %s176 = ssub.s32 256, 256
          %177 = vsyncadd %s169, %s176
          %s178 = smul.addr %s174, 2
          %s179 = smul.addr %s178, 64
          %s180 = scalar_lea.hbm %s0, %s179
          %s181 = sshll.u32 %s172, 4
          %s182 = int_to_ptr.vmem [resolvable:$true] %s181
          %187 = dma.hbm_to_vmem [thread:$0]  %s180, 256, %s182, %s169, 128, 128, 8
        $region24: #{tpu_custom_call.1} parent=19 // pred_fallthru
          _
      $region20: #{tpu_custom_call.1} parent=5 // pred_fallthru
        _
      %p188 = scmp.le.s32.totalorder 1, %s20
      %p189 = scmp.lt.s32.totalorder %s20, 3
      %p190 = pnand %p188, %p189
      %p191 = pneg %p190
      // Predicated region
      $region25: #{tpu_custom_call.1} parent=5 // pred_check
        _
      $region26: #{tpu_custom_call.1} parent=5 // pred_check_branch
        %193 = sbr.rel (%p190) target = $region28
      $region27: #{tpu_custom_call.1} parent=5 // pred_region
        %s194 = ssub.s32 %s20, 1
        %s195 = sand.u32 %s47, 1
        %s196 = scalar_lea.sflag [#allocation3], %s195
        %s197 = sand.u32 %s47, 1
        %s198 = smul.addr %s197, 16
        %s199 = scalar_lea.vmem [#allocation2], %s198
        // Predicated region
        $region29: #{tpu_custom_call.1} parent=27 // pred_check
          %p200 = pneg %p60
        $region30: #{tpu_custom_call.1} parent=27 // pred_check_branch
          %202 = sbr.rel (%p200) target = $region32
        $region31: #{tpu_custom_call.1} parent=27 // pred_region
          %203 = dma.done %s196, 256
        $region32: #{tpu_custom_call.1} parent=27 // pred_fallthru
          _
        // Predicated region
        $region33: #{tpu_custom_call.1} parent=27 // pred_check
          %p204 = pneg %p81
        $region34: #{tpu_custom_call.1} parent=27 // pred_check_branch
          %206 = sbr.rel (%p204) target = $region36
        $region35: #{tpu_custom_call.1} parent=27 // pred_region
          %207 = dma.done [#allocation6], 1152
        $region36: #{tpu_custom_call.1} parent=27 // pred_fallthru
          _
        %s208 = sand.u32 %s47, 1
        %s209 = scalar_lea.sflag [#allocation3], %s208
        %s210 = sand.u32 %s47, 1
        %s211 = smul.addr %s210, 16
        %s212 = scalar_lea.vmem [#allocation2], %s211
        %p213 = pneg %p60
        %p214 = pneg %p57
        %p215 = pneg %p81
        %p216 = pneg %p78
        %p217 = pneg %p107
        %p218 = pneg %p104
        %s219 = sand.u32 %s94, 1
        %s220 = scalar_lea.sflag [#allocation4], %s219
        %s221 = sand.u32 %s94, 1
        %s222 = scalar_lea.vmem [#allocation7], %s221
        %p223 = pneg %p133
        %p224 = pneg %p130
        %s225 = sand.u32 %s120, 1
        %s226 = scalar_lea.sflag [#allocation9], %s225
        %s227 = sand.u32 %s120, 1
        %s228 = scalar_lea.vmem [#allocation8], %s227
        %s229 = sadd.s32 %s29, %s30
        %s230 = smul.u32 2, %s229
        %v232 = vld [vmem:[%s199] sm:$0xff]
        %v233 = vld [vmem:[%s199 + $0x8] sm:$0xff]
        %v234 = vld [vmem:[#allocation5] sm:$0xf]
        %v235 = vld [vmem:[#allocation5 + $0x4] sm:$0xf]
        %v236 = vld [vmem:[#allocation5 + $0x8] sm:$0xf]
        %v237 = vld [vmem:[#allocation5 + $0xc] sm:$0xf]
        %v238 = vld [vmem:[#allocation5 + $0x10] sm:$0xf]
        %v239 = vld [vmem:[#allocation5 + $0x14] sm:$0xf]
        %v240 = vld [vmem:[#allocation5 + $0x18] sm:$0xf]
        %v241 = vld [vmem:[#allocation5 + $0x1c] sm:$0xf]
        %v242 = vld [vmem:[#allocation5 + $0x20] sm:$0xf]
        %v243 = vld [vmem:[#allocation5 + $0x24] sm:$0xf]
        %v244 = vld [vmem:[#allocation5 + $0x28] sm:$0xf]
        %v245 = vld [vmem:[#allocation5 + $0x2c] sm:$0xf]
        %v246 = vld [vmem:[#allocation5 + $0x30] sm:$0xf]
        %v247 = vld [vmem:[#allocation5 + $0x34] sm:$0xf]
        %v248 = vld [vmem:[#allocation5 + $0x38] sm:$0xf]
        %v249 = vld [vmem:[#allocation5 + $0x3c] sm:$0xf]
        %v250 = vld [vmem:[#allocation5 + $0x40] sm:$0xf]
        %v251 = vld [vmem:[#allocation5 + $0x44] sm:$0xf]
        %v254 = vunpack.c.l.b16 %v232
        %v255 = vunpack.c.h.b16 %v232
        %v256 = vunpack.c.l.b16 %v233
        %v257 = vunpack.c.h.b16 %v233
        %v258 = vpack.c.b16 %v256, %v254
        %v259 = vpack.c.b16 %v257, %v255
        %v279 = vunpack.c.l.b16 %v234
        %v280 = vunpack.c.l.b16 %v235
        %v281 = vunpack.c.l.b16 %v236
        %v282 = vunpack.c.l.b16 %v237
        %v283 = vunpack.c.l.b16 %v238
        %v284 = vunpack.c.l.b16 %v239
        %v285 = vunpack.c.l.b16 %v240
        %v286 = vunpack.c.l.b16 %v241
        %v287 = vunpack.c.l.b16 %v242
        %v288 = vunpack.c.l.b16 %v243
        %v289 = vunpack.c.l.b16 %v244
        %v290 = vunpack.c.l.b16 %v245
        %v291 = vunpack.c.l.b16 %v246
        %v292 = vunpack.c.l.b16 %v247
        %v293 = vunpack.c.l.b16 %v248
        %v294 = vunpack.c.l.b16 %v249
        %v295 = vunpack.c.l.b16 %v250
        %v296 = vunpack.c.l.b16 %v251
        %v297 = vpack.c.b16 %v280, %v279
        %v298 = vpack.c.b16 %v282, %v281
        %v299 = vpack.c.b16 %v284, %v283
        %v300 = vpack.c.b16 %v286, %v285
        %v301 = vpack.c.b16 %v288, %v287
        %v302 = vpack.c.b16 %v290, %v289
        %v303 = vpack.c.b16 %v292, %v291
        %v304 = vpack.c.b16 %v294, %v293
        %v305 = vpack.c.b16 %v296, %v295
        %vm315 = vcmask 130048
        %v317 = vsel %vm315, %v259, 0
        %319 = vmatprep.subr.bf16.mxu0 0
        %320 = vmatpush1.bf16.msra.mxu0 %v304
        %321 = vmatprep.subr.bf16.mxu0 0
        %322 = vmatpush1.bf16.msra.mxu0 %v303
        %323 = vmatprep.subr.bf16.mxu0 0
        %324 = vmatpush1.bf16.msra.mxu0 %v302
        %325 = vmatprep.subr.bf16.mxu0 0
        %326 = vmatpush1.bf16.msra.mxu0 %v301
        %327 = vmatprep.subr.bf16.mxu0 0
        %328 = vmatpush1.bf16.msra.mxu0 %v300
        %329 = vmatprep.subr.bf16.mxu0 0
        %330 = vmatpush1.bf16.msra.mxu0 %v299
        %331 = vmatprep.subr.bf16.mxu0 0
        %332 = vmatpush1.bf16.msra.mxu0 %v298
        %333 = vmatprep.subr.bf16.mxu0 0
        %334 = vmatpush1.bf16.msra.mxu0 %v297
        %335 = vmatprep.subr.bf16.mxu0 0
        %336 = vmatpush2.bf16.msra.mxu0 0
        %337 = vmatprep.subr.bf16.mxu0 0
        %338 = vmatpush2.bf16.msra.mxu0 0
        %339 = vmatprep.subr.bf16.mxu0 0
        %340 = vmatpush2.bf16.msra.mxu0 0
        %341 = vmatprep.subr.bf16.mxu0 0
        %342 = vmatpush2.bf16.msra.mxu0 0
        %343 = vmatprep.subr.bf16.mxu0 0
        %344 = vmatpush2.bf16.msra.mxu0 0
        %345 = vmatprep.subr.bf16.mxu0 0
        %346 = vmatpush2.bf16.msra.mxu0 0
        %347 = vmatprep.subr.bf16.mxu0 0
        %348 = vmatpush2.bf16.msra.mxu0 0
        %349 = vmatprep.subr.bf16.mxu0 0
        %350 = vmatpush2.bf16.msra.mxu0 %v305
        %351 = vmatprep.mubr.bf16.mxu0 %v317
        %352 = vmatmul.mubr.bf16.gmra.mxu0 %v258
        %v353 = vpop.f32.mrf.mxu0
        %v354 = vadd.f32 0.0, %v353
        %v355 = vpop.f32.mrf.mxu0
        %v356 = vpop.f32.mrf.mxu0
        %v357 = vadd.f32 0.0, %v356
        %v358 = vpop.f32.mrf.mxu0
        %359 = vdwg.mxu0
        %p360 = scmp.eq.s32.totalorder %s30, 0
        // Predicated region
        $region37: #{tpu_custom_call.1} parent=27 // pred_check
          %p361 = pneg %p360
        $region38: #{tpu_custom_call.1} parent=27 // pred_check_branch
          %363 = sbr.rel (%p361) target = $region40
        $region39: #{tpu_custom_call.1} parent=27 // pred_region
          %364 = vst [vmem:[%s222] sm:$0x1] 0.0
          %365 = vst [vmem:[%s228] sm:$0x1] 0.0
        $region40: #{tpu_custom_call.1} parent=27 // pred_fallthru
          _
        %v366 = vadd.f32 %v354, %v357
        %v367 = vrot.slane %v366, 4
        %v368 = vadd.f32 %v366, %v367
        %v369 = vrot.slane %v368, 2
        %v370 = vadd.f32 %v368, %v369
        %v371 = vrot.slane %v370, 1
        %v372 = vadd.f32 %v370, %v371
        %v373 = vmul.f32 %v354, %v354
        %v374 = vmul.f32 %v357, %v357
        %v375 = vadd.f32 %v373, %v374
        %v376 = vrot.slane %v375, 4
        %v377 = vadd.f32 %v375, %v376
        %v378 = vrot.slane %v377, 2
        %v379 = vadd.f32 %v377, %v378
        %v380 = vrot.slane %v379, 1
        %v381 = vadd.f32 %v379, %v380
        %v382 = vld [vmem:[%s222] sm:$0x1]
        %v383 = vadd.f32 %v382, %v372
        %384 = vst [vmem:[%s222] sm:$0x1] %v383
        %v385 = vld [vmem:[%s228] sm:$0x1]
        %v386 = vadd.f32 %v385, %v381
        %387 = vst [vmem:[%s228] sm:$0x1] %v386
        %s388 = sand.u32 %s94, 1
        %s389 = scalar_lea.sflag [#allocation4], %s388
        %s390 = sand.u32 %s94, 1
        %s391 = scalar_lea.vmem [#allocation7], %s390
        %s392 = sand.u32 %s120, 1
        %s393 = scalar_lea.sflag [#allocation9], %s392
        %s394 = sand.u32 %s120, 1
        %s395 = scalar_lea.vmem [#allocation8], %s394
        // Predicated region
        $region41: #{tpu_custom_call.1} parent=27 // pred_check
          %p396 = pneg %p104
        $region42: #{tpu_custom_call.1} parent=27 // pred_check_branch
          %398 = sbr.rel (%p396) target = $region44
        $region43: #{tpu_custom_call.1} parent=27 // pred_region
          %s400 = ssub.s32 16, 16
          %401 = vsyncadd %s389, %s400
          %s402 = smul.addr %s29, 16
          %s403 = scalar_lea.hbm %s2, %s402
          %s405 = sshll.u32 %s391, 4
          %s406 = int_to_ptr.vmem [resolvable:$true] %s405
          %408 = dma.vmem_to_hbm [thread:$0]  %s406, 16, %s403, %s389
        $region44: #{tpu_custom_call.1} parent=27 // pred_fallthru
          _
        // Predicated region
        $region45: #{tpu_custom_call.1} parent=27 // pred_check
          %p409 = pneg %p130
        $region46: #{tpu_custom_call.1} parent=27 // pred_check_branch
          %411 = sbr.rel (%p409) target = $region48
        $region47: #{tpu_custom_call.1} parent=27 // pred_region
          %s413 = ssub.s32 16, 16
          %414 = vsyncadd %s393, %s413
          %s415 = smul.addr %s29, 16
          %s416 = scalar_lea.hbm %s3, %s415
          %s418 = sshll.u32 %s395, 4
          %s419 = int_to_ptr.vmem [resolvable:$true] %s418
          %421 = dma.vmem_to_hbm [thread:$0]  %s419, 16, %s416, %s393
        $region48: #{tpu_custom_call.1} parent=27 // pred_fallthru
          _
      $region28: #{tpu_custom_call.1} parent=5 // pred_fallthru
        _
      %p422 = scmp.le.s32.totalorder 2, %s20
      // Predicated region
      $region49: #{tpu_custom_call.1} parent=5 // pred_check
        %p423 = pneg %p422
      $region50: #{tpu_custom_call.1} parent=5 // pred_check_branch
        %425 = sbr.rel (%p423) target = $region52
      $region51: #{tpu_custom_call.1} parent=5 // pred_region
        %s426 = ssub.s32 %s20, 2
        // Predicated region
        $region53: #{tpu_custom_call.1} parent=51 // pred_check
          %p427 = pneg %p110
        $region54: #{tpu_custom_call.1} parent=51 // pred_check_branch
          %429 = sbr.rel (%p427) target = $region56
        $region55: #{tpu_custom_call.1} parent=51 // pred_region
          %s430 = sand.u32 %s95, 1
          %s431 = scalar_lea.sflag [#allocation4], %s430
          %s432 = sand.u32 %s95, 1
          %s433 = scalar_lea.vmem [#allocation7], %s432
          %434 = dma.done %s431, 16
        $region56: #{tpu_custom_call.1} parent=51 // pred_fallthru
          _
        // Predicated region
        $region57: #{tpu_custom_call.1} parent=51 // pred_check
          %p435 = pneg %p136
        $region58: #{tpu_custom_call.1} parent=51 // pred_check_branch
          %437 = sbr.rel (%p435) target = $region60
        $region59: #{tpu_custom_call.1} parent=51 // pred_region
          %s438 = sand.u32 %s121, 1
          %s439 = scalar_lea.sflag [#allocation9], %s438
          %s440 = sand.u32 %s121, 1
          %s441 = scalar_lea.vmem [#allocation8], %s440
          %442 = dma.done %s439, 16
        $region60: #{tpu_custom_call.1} parent=51 // pred_fallthru
          _
      $region52: #{tpu_custom_call.1} parent=5 // pred_fallthru
        _
    $region6: #{tpu_custom_call.1} parent=1 // loop_footer
      %s24 = sadd.s32 1, %s20
    $region7: #{tpu_custom_call.1} parent=1 // loop_footer_branch
      %19 = sbr.rel target = $region3
    $region8: #{tpu_custom_call.1} parent=1 // loop_exit
      _
    %443 = vsyncpa [#allocation3], 1
    %s444 = scalar_lea.sflag [#allocation3], 1
    %445 = vsyncpa %s444, 1
    %446 = vsyncpa [#allocation6], 1
    %447 = vsyncpa [#allocation4], 1
    %s448 = scalar_lea.sflag [#allocation4], 1
    %449 = vsyncpa %s448, 1
    %450 = vsyncpa [#allocation9], 1
    %s451 = scalar_lea.sflag [#allocation9], 1
    %452 = vsyncpa %s451, 1

</llo_original>
